<compile_context>
chip_gen: v5e
topology: v5e:2x2
jax: 0.10.0
libtpu: 0.0.40
codegen_flags: <defaults>
</compile_context>

<pallas_src>
import jax
import jax.numpy as jnp
from jax.experimental import pallas as pl
from jax.experimental.pallas import tpu as pltpu

LANES = 128
SUBLANES = 8
TARGET_BLOCK_BYTES = 4 << 20   # ~4 MiB per block; x2 (in+out) x2 (double-buffer) = 16 MiB VMEM
VMEM_LIMIT_BYTES = 32 << 20    # explicit: keeps v5e (16 MiB scoped default) from OOM/shrinking buffers
SMALL_INPUT_BYTES = 512 << 10  # below this, skip pallas_call: fused XLA is already one HBM pass


def _dfs_kernel(idx_ref, lw_ref, feat_ref, out_ref):
    # idx_ref : SMEM int32[1]        (scalar-prefetched, clamped feature index)
    # lw_ref  : SMEM float32[n_feat] (layerweight parameter vector)
    # feat_ref/out_ref : VMEM tiles of shape (block_rows, W)
    w = lw_ref[idx_ref[0]]                                    # dynamic scalar gather from SMEM
    # ONE sigmoid per tile (f32 for accuracy), then cast so bf16 tiles
    # multiply natively in bf16 (halves vreg traffic on v6e/v7x).
    gate = jax.nn.sigmoid(jnp.full((1, 1), w, jnp.float32)).astype(out_ref.dtype)
    out_ref[...] = feat_ref[...] * gate                       # VPU broadcast multiply


def _pick_width(total):
    """Widest 128-multiple that divides `total` (lane-dense, padding-free slab)."""
    for w in (4096, 2048, 1024, 512, 256, 128):
        if total % w == 0:
            return w
    return None


def dynamic_feature_selection(idx, layerweight, feat, *,
                              donate_feat=False,
                              small_input_bytes=SMALL_INPUT_BYTES):
    """feat * sigmoid(layerweight[idx]); feat of any shape (e.g. NCHW), elementwise.

    donate_feat=True aliases the feature slab input to the output
    (input_output_aliases={2: 0}); only use when the caller actually donates feat.
    """
    dtype = feat.dtype
    total = int(feat.size)
    itemsize = int(jnp.dtype(dtype).itemsize)
    n_w = int(layerweight.shape[0])

    # PyTorch raises IndexError on a bad index; catch static ints eagerly,
    # clamp traced values so a bad idx can't do a silent OOB SMEM read.
    if isinstance(idx, int):
        assert 0 <= idx < n_w, f"idx {idx} out of range for layerweight of length {n_w}"
    idx_i32 = jnp.clip(jnp.asarray(idx, dtype=jnp.int32), 0, n_w - 1)

    w_lanes = _pick_width(total)
    nbytes = total * itemsize

    if w_lanes is None or nbytes < small_input_bytes:
        # Ragged element count (not a 128-multiple) or tiny input: plain XLA
        # fuses the scalar gate into a single HBM pass — strictly better than
        # any pad/slice round-trip or kernel-launch overhead at this size.
        gate = jax.nn.sigmoid(layerweight[idx_i32]).astype(dtype)
        return feat * gate

    rows = total // w_lanes
    slab = feat.reshape(rows, w_lanes)          # free view: contiguous row-major reshape

    # ~4 MiB of data per grid step, rounded to a sublane multiple.
    block_rows = TARGET_BLOCK_BYTES // (w_lanes * itemsize)
    block_rows = max(SUBLANES, (block_rows // SUBLANES) * SUBLANES)
    if block_rows >= rows:
        if rows >= 2 * SUBLANES:
            # Would collapse to grid=1: split into >=2 blocks so the "parallel"
            # grid axis can feed both v7x TensorCores.
            half = -(-rows // 2)
            block_rows = -(-half // SUBLANES) * SUBLANES
        else:
            block_rows = rows                   # truly tiny slab: single full block
    grid = pl.cdiv(rows, block_rows)

    out = pl.pallas_call(
        _dfs_kernel,
        out_shape=jax.ShapeDtypeStruct(slab.shape, dtype),
        grid_spec=pltpu.PrefetchScalarGridSpec(
            num_scalar_prefetch=1,              # idx -> SMEM, passed to index_maps
            grid=(grid,),
            in_specs=[
                # layerweight vector: tiny, keep the whole thing in SMEM
                pl.BlockSpec(memory_space=pltpu.MemorySpace.SMEM),
                # feature slab: ~4 MiB row tiles, full (lane-dense) width
                pl.BlockSpec((block_rows, w_lanes), lambda i, idx_ref: (i, 0)),
            ],
            out_specs=pl.BlockSpec((block_rows, w_lanes), lambda i, idx_ref: (i, 0)),
        ),
        compiler_params=pltpu.CompilerParams(
            dimension_semantics=("parallel",),
            vmem_limit_bytes=VMEM_LIMIT_BYTES),
        # Alias slab (call-arg index 2: after idx, layerweight) to output 0 when donated.
        input_output_aliases=({2: 0} if donate_feat else {}),
    )(jnp.reshape(idx_i32, (1,)), layerweight, slab)

    return out.reshape(feat.shape)


if __name__ == "__main__":
    key = jax.random.PRNGKey(0)
    k_feat, k_w, k_big = jax.random.split(key, 3)

    # Module setup: feat_ids has 4 entries -> layerweight shape (4,).
    # PyTorch default init is zeros; use small deterministic non-zero values
    # so the sigmoid gate is non-trivial (synthetic params, no checkpoint).
    n_feat_ids = 4
    layerweight = jax.random.normal(k_w, (n_feat_ids,), dtype=jnp.float32) * 0.5
    idx = 2
    gate_ref = jax.nn.sigmoid(layerweight[idx])

    # 1) Small NCHW demo shape, forced through the Pallas kernel.
    feat = jax.random.normal(k_feat, (2, 4, 16, 16), dtype=jnp.float32)
    out = jax.block_until_ready(
        dynamic_feature_selection(idx, layerweight, feat, small_input_bytes=0))
    ref = feat * gate_ref
    assert out.shape == feat.shape and out.dtype == feat.dtype
    assert jnp.allclose(out, ref, atol=1e-6, rtol=1e-6)

    # 2) Same small shape through the default dispatch (tiny -> fused XLA fast path).
    out_small = jax.block_until_ready(dynamic_feature_selection(idx, layerweight, feat))
    assert jnp.allclose(out_small, ref, atol=1e-6, rtol=1e-6)

    # 3) Larger f32 map (1 MiB): kernel path with a >=2-step "parallel" grid.
    feat_big = jax.random.normal(k_big, (2, 32, 64, 64), dtype=jnp.float32)
    out_big = jax.block_until_ready(dynamic_feature_selection(idx, layerweight, feat_big))
    assert jnp.allclose(out_big, feat_big * gate_ref, atol=1e-6, rtol=1e-6)

    # 4) bf16 feature map: gate cast + multiply performed in bf16 inside the kernel.
    feat_bf16 = feat_big.astype(jnp.bfloat16)
    out_bf16 = jax.block_until_ready(dynamic_feature_selection(idx, layerweight, feat_bf16))
    ref_bf16 = (feat_bf16.astype(jnp.float32) * gate_ref).astype(jnp.bfloat16)
    assert out_bf16.dtype == jnp.bfloat16
    assert jnp.allclose(out_bf16.astype(jnp.float32), ref_bf16.astype(jnp.float32),
                        atol=2e-2, rtol=2e-2)

    # 5) Ragged element count (not a multiple of 128): fused XLA fallback, exact match.
    feat_rag = jax.random.normal(k_feat, (3, 5, 7), dtype=jnp.float32)
    out_rag = jax.block_until_ready(dynamic_feature_selection(idx, layerweight, feat_rag))
    assert jnp.allclose(out_rag, feat_rag * gate_ref, atol=1e-6, rtol=1e-6)

    print("KERNEL_OK")
</pallas_src>

<mosaic_0001>
module attributes {stable_mosaic.version = 11 : i64} {
  func.func @_dfs_kernel(%arg0: i32, %arg1: memref<1xi32, #tpu.memory_space<smem>>, %arg2: memref<4xf32, #tpu.memory_space<smem>>, %arg3: memref<1x2048xf32, #tpu.memory_space<vmem>>, %arg4: memref<1x2048xf32, #tpu.memory_space<vmem>>) attributes {dimension_semantics = [#tpu.dimension_semantics<parallel>], iteration_bounds = array<i64: 1>, scalar_prefetch = 1 : i64, scratch_operands = 0 : i64, tpu.core_type = #tpu.core_type<tc>, window_params = [{transform_indices = @transform_0, window_bounds = array<i64: 4>}, {transform_indices = @transform_1, window_bounds = array<i64: 1, 2048>}, {transform_indices = @transform_2, window_bounds = array<i64: 1, 2048>}]} {
    %c0 = arith.constant 0 : index
    %0 = memref.load %arg1[%c0] : memref<1xi32, #tpu.memory_space<smem>>
    %1 = arith.index_cast %0 : i32 to index
    %2 = memref.load %arg2[%1] : memref<4xf32, #tpu.memory_space<smem>>
    %3 = vector.broadcast %2 : f32 to vector<1x1xf32>
    %4 = arith.negf %3 : vector<1x1xf32>
    %5 = math.exp %4 : vector<1x1xf32>
    %cst = arith.constant 1.000000e+00 : f32
    %6 = vector.broadcast %cst : f32 to vector<1x1xf32>
    %7 = arith.addf %6, %5 : vector<1x1xf32>
    %8 = arith.divf %6, %7 : vector<1x1xf32>
    %c0_0 = arith.constant 0 : index
    %c0_1 = arith.constant 0 : index
    %9 = vector.load %arg3[%c0_0, %c0_1] : memref<1x2048xf32, #tpu.memory_space<vmem>>, vector<1x2048xf32>
    %10 = vector.broadcast %8 : vector<1x1xf32> to vector<1x2048xf32>
    %11 = arith.mulf %9, %10 : vector<1x2048xf32>
    %c0_2 = arith.constant 0 : index
    %c0_3 = arith.constant 0 : index
    %12 = vector.load %arg4[%c0_2, %c0_3] : memref<1x2048xf32, #tpu.memory_space<vmem>>, vector<1x2048xf32>
    tpu.vector_store %arg4[%c0_2, %c0_3], %11 {strides = array<i32>} : memref<1x2048xf32, #tpu.memory_space<vmem>>, vector<1x2048xf32>,
    return
  }
  func.func @transform_0(%arg0: i32, %arg1: memref<1xi32, #tpu.memory_space<smem>>) -> i32 {
    %c0_i32 = arith.constant 0 : i32
    %c0_i32_0 = arith.constant 0 : i32
    return %c0_i32 : i32
  }
  func.func @transform_1(%arg0: i32, %arg1: memref<1xi32, #tpu.memory_space<smem>>) -> (i32, i32) {
    %c0_i32 = arith.constant 0 : i32
    %c0_i32_0 = arith.constant 0 : i32
    return %arg0, %c0_i32 : i32, i32
  }
  func.func @transform_2(%arg0: i32, %arg1: memref<1xi32, #tpu.memory_space<smem>>) -> (i32, i32) {
    %c0_i32 = arith.constant 0 : i32
    %c0_i32_0 = arith.constant 0 : i32
    return %arg0, %c0_i32 : i32, i32
  }
}

</mosaic_0001>

<llo_original>
// kernel: tpu_custom_call.1
$region0: #{tpu_custom_call.1}
  #allocation0 [shape = 'u32[]', space=smem, size = 0x4, offset = 0x4, fixed_abs, tag = 'smem constant byte address 0x4 - core index']
  #allocation1 [shape = 'u32[72,128]{1,0:T(1,128)}', space=vmem, size = 0x9000, scoped, tag = 'internal scratch']
  #allocation2 [shape = 's32[1]{0}', space=sflag, size = 0x4, scoped, tag = 'scoped memory for tpu_custom_call.1']
  #allocation3 [shape = 's32[1]{0:T(128)S(6)}', space=smem, size = 0x200, scoped, tag = 'prefetched SMEM operand 0']
  %s0 = inlined_call_operand.<no memory space> [shape: s32[1], index: 0, kind: input, shape index: {}]
  %s1 = inlined_call_operand.vmem [shape: f32[4], index: 1, kind: input, shape index: {}]
  %s2 = inlined_call_operand.hbm [shape: f32[1,2048], index: 2, kind: input, shape index: {}]
  %s3 = inlined_call_operand.hbm [shape: f32[1,2048], index: 3, kind: output, shape index: {}]
  %s4 = sld [smem:[#allocation0]]
  $region26: #{tpu_custom_call.1} parent=0
    _
  %s6 = ssub.s32 1, %s4
  %s7 = scalar_select 0, %s6, %s4
  %8 = sst [smem:[#allocation3]] %s0
  $region1: #{tpu_custom_call.1} parent=0
    #allocation4 [shape = 'u8[512]{0}', space=smem, size = 0x200, scoped, tag = 'input window, operand 1, single buffered']
    #allocation5 [shape = 's32[1]{0}', space=sflag, size = 0x4, scoped, tag = 'scoped memory for tpu_custom_call.1']
    #allocation6 [shape = 's32[1]{0}', space=sflag, size = 0x4, scoped, tag = 'scoped memory for tpu_custom_call.1']
    #allocation7 [shape = 's32[1]{0}', space=sflag, size = 0x4, scoped, tag = 'scoped memory for tpu_custom_call.1']
    #allocation8 [shape = 'u8[8192]{0}', space=vmem, size = 0x2000, scoped, tag = 'input window, operand 2, single buffered']
    #allocation9 [shape = 'u8[8192]{0}', space=vmem, size = 0x2000, scoped, tag = 'output window, operand 0, single buffered']
    %9 = vsyncpa [#allocation7], 0
    %10 = vsyncpa [#allocation5], 0
    %11 = vsyncpa [#allocation6], 0
    // Predicated region
    $region2: #{tpu_custom_call.1} parent=1 // pred_check
      _
    $region3: #{tpu_custom_call.1} parent=1 // pred_check_branch
      %13 = sbr.rel (0) target = $region5
    $region4: #{tpu_custom_call.1} parent=1 // pred_region
      %15 = vsyncadd [#allocation7], 0
      %s17 = sshll.u32 %s1, 4
      %s18 = int_to_ptr.vmem [resolvable:$true] %s17
      %20 = dma.vmem_to_smem %s18, 16, [#allocation4], [#allocation7]
    $region5: #{tpu_custom_call.1} parent=1 // pred_fallthru
      _
    // Predicated region
    $region6: #{tpu_custom_call.1} parent=1 // pred_check
      _
    $region7: #{tpu_custom_call.1} parent=1 // pred_check_branch
      %22 = sbr.rel (0) target = $region9
    $region8: #{tpu_custom_call.1} parent=1 // pred_region
      %24 = vsyncadd [#allocation5], 0
      %s26 = sshll.u32 %s2, 4
      %s27 = int_to_ptr.hbm [resolvable:$true] %s26
      %s28 = sshll.u32 [#allocation8], 4
      %s29 = int_to_ptr.vmem [resolvable:$true] %s28
      %31 = dma.hbm_to_vmem [thread:$0]  %s27, 256, %s29, [#allocation5]
    $region9: #{tpu_custom_call.1} parent=1 // pred_fallthru
      _
    // Predicated region
    $region10: #{tpu_custom_call.1} parent=1 // pred_check
      _
    $region11: #{tpu_custom_call.1} parent=1 // pred_check_branch
      %33 = sbr.rel (0) target = $region13
    $region12: #{tpu_custom_call.1} parent=1 // pred_region
      %35 = dma.done [#allocation7], 16
    $region13: #{tpu_custom_call.1} parent=1 // pred_fallthru
      _
    // Predicated region
    $region14: #{tpu_custom_call.1} parent=1 // pred_check
      _
    $region15: #{tpu_custom_call.1} parent=1 // pred_check_branch
      %37 = sbr.rel (0) target = $region17
    $region16: #{tpu_custom_call.1} parent=1 // pred_region
      %39 = dma.done [#allocation5], 256
    $region17: #{tpu_custom_call.1} parent=1 // pred_fallthru
      _
    %40 = sfence
    %s41 = sld [smem:[#allocation3]]
    %s42 = sld [smem:[#allocation4 + %s41]]
    %v43 = vstv %s42
    %v44 = vxor.u32 %v43, 2147483648
    %v45 = vmul.f32 %v44, 1.442695
    %v46 = vpow.pop %v45
    %v47 = vadd.f32 %v46, 1.0
    %v48 = vrcp.pop %v47
    %v49 = vmul.f32 %v47, %v48
    %v50 = vsub.f32 1.0, %v49
    %v51 = vmul.f32 %v48, %v50
    %v52 = vadd.f32 %v48, %v51
    %vm53 = vweird.f32 %v47
    %vm54 = vweird.f32 %v48
    %vm55 = vmor %vm53, %vm54
    %v56 = vsel %vm55, %v48, %v52
    %v57 = vand.u32 2147483647, %v47
    %vm58 = vcmp.eq.f32.partialorder %v57, 8.507059e+37
    %v59 = vand.u32 %v47, 2147483648
    %v60 = vor.u32 1.1754944e-38, %v59
    %v61 = vsel %vm58, %v60, %v56
    %v62 = vmul.f32 1.0, %v61
    %v63 = vld [vmem:[#allocation8] sm:$0xff]
    %v64 = vld [vmem:[#allocation8 + $0x8] sm:$0xff]
    %v65 = vmul.f32 %v63, %v62
    %v66 = vmul.f32 %v64, %v62
    %67 = vst [vmem:[#allocation9] sm:$0xff] %v65
    %68 = vst [vmem:[#allocation9 + $0x8] sm:$0xff] %v66
    // Predicated region
    $region18: #{tpu_custom_call.1} parent=1 // pred_check
      _
    $region19: #{tpu_custom_call.1} parent=1 // pred_check_branch
      %70 = sbr.rel (0) target = $region21
    $region20: #{tpu_custom_call.1} parent=1 // pred_region
      %72 = vsyncadd [#allocation6], 0
      %s74 = sshll.u32 [#allocation9], 4
      %s75 = int_to_ptr.vmem [resolvable:$true] %s74
      %s76 = sshll.u32 %s3, 4
      %s77 = int_to_ptr.hbm [resolvable:$true] %s76
      %79 = dma.vmem_to_hbm [thread:$0]  %s75, 256, %s77, [#allocation6]
    $region21: #{tpu_custom_call.1} parent=1 // pred_fallthru
      _
    // Predicated region
    $region22: #{tpu_custom_call.1} parent=1 // pred_check
      _
    $region23: #{tpu_custom_call.1} parent=1 // pred_check_branch
      %81 = sbr.rel (0) target = $region25
    $region24: #{tpu_custom_call.1} parent=1 // pred_region
      %83 = dma.done [#allocation6], 256
    $region25: #{tpu_custom_call.1} parent=1 // pred_fallthru
      _
    %84 = vsyncpa [#allocation5], 1
    %85 = vsyncpa [#allocation6], 1
    %86 = vsyncpa [#allocation7], 1

</llo_original>
